<compile_context>
chip_gen: v6e
topology: v6e:2x2x1
jax: 0.10.0
libtpu: 0.0.40
codegen_flags: <defaults>
</compile_context>

<pallas_src>
import functools

import jax
import jax.numpy as jnp
from jax.experimental import pallas as pl
from jax.experimental.pallas import tpu as pltpu


def _round_up(n: int, m: int) -> int:
    return ((n + m - 1) // m) * m


def _linear_in_relu_kernel(x_ref, w_ref, o_ref, *, inv_l, compute_dtype):
    # x_ref: (1, C_in, L)   w_ref: (TCO, C_in)   o_ref: (1, TCO, L)
    x = x_ref[0]                                   # (C_in, L)
    w = w_ref[...]                                 # (TCO, C_in)
    if compute_dtype is not None:
        # In-kernel cast: VPU work hidden under DMA/MXU, no extra HBM pass.
        x = x.astype(compute_dtype)
        w = w.astype(compute_dtype)

    # Fused permute -> Linear -> permute (bias dropped: cancelled by the
    # following instance norm).
    y = jnp.dot(w, x, preferred_element_type=jnp.float32)      # (TCO, L) f32

    # InstanceNorm1d (affine=False, biased variance, eps=1e-5), single-pass
    # sum/sumsq stats in f32.  NOTE: E[y^2]-E[y]^2 can lose precision vs a
    # two-pass formulation when |mean| >> std; clamped at 0 and accepted as a
    # documented trade-off (saves a full extra pass over the slab).
    s1 = jnp.sum(y, axis=1, keepdims=True)
    s2 = jnp.sum(y * y, axis=1, keepdims=True)
    mean = s1 * inv_l
    var = jnp.maximum(s2 * inv_l - mean * mean, 0.0)
    inv_std = jax.lax.rsqrt(var + 1e-5)

    # Normalize + LeakyReLU(0.1) fused; max(y, 0.1*y) == leaky_relu(y, 0.1).
    y_n = (y - mean) * inv_std
    o_ref[0] = jnp.maximum(y_n, 0.1 * y_n).astype(o_ref.dtype)


def _vmem_budget_bytes() -> int:
    """~80% of this generation's VMEM (v7x ~51 MiB, v5e/v6e ~102 MiB)."""
    try:
        cap = int(pltpu.get_tpu_info().vmem_capacity_bytes)
    except Exception:
        cap = 64 * 2**20  # conservative (v7x-sized) fallback
    return int(0.8 * cap)


def linear_batch_relu(x, weight, bias=None, *, co_tile=256, use_bf16_matmul=False):
    """LinearBatchRelu forward.

    x: (B, C_in, L); weight: (C_out, C_in); bias: (C_out,).

    `bias` is accepted for API parity but is mathematically a no-op here: the
    following InstanceNorm1d is affine=False with per-sample statistics, so
    (Wx + b) - mean(Wx + b) == Wx - mean(Wx) and the variance is unchanged.
    Do NOT reuse this kernel for an affine / running-stats InstanceNorm.
    """
    del bias  # exact cancellation, see docstring
    B, C_in, L = x.shape
    C_out, c_in_w = weight.shape
    assert c_in_w == C_in
    out_dtype = x.dtype

    x_elt = jnp.dtype(x.dtype).itemsize
    w_elt = jnp.dtype(weight.dtype).itemsize
    out_elt = jnp.dtype(out_dtype).itemsize

    # ---- C_out tiling (ragged L handled in-kernel: no pad/slice pass on L) --
    c_out_8 = _round_up(C_out, 8)

    def vmem_need(tco: int) -> int:
        # double-buffered x / weight / out blocks + f32 y slab + headroom.
        return (2 * C_in * L * x_elt
                + 2 * tco * C_in * w_elt
                + 2 * tco * L * out_elt
                + tco * L * 4
                + (4 << 20))

    budget = _vmem_budget_bytes()
    tco = min(_round_up(co_tile, 8), c_out_8)
    while tco > 8 and vmem_need(tco) > budget:
        tco = max(8, _round_up(tco // 2, 8))
    # TODO(synk): if even tco=8 exceeds the budget (extremely long L), add an
    # inner "arbitrary" L grid axis with two-phase (sum/sumsq -> normalize)
    # stats instead of shrinking tco further.

    n_co = pl.cdiv(c_out_8, tco)

    # Megacore (v7x: 2 TensorCores): split the channel axis further when the
    # grid would otherwise have too few steps to shard.
    max_splits = c_out_8 // 8
    if B * n_co < 4 and max_splits > n_co:
        n_co = min(max_splits, pl.cdiv(4, B))

    if n_co == 1:
        # Single tile: full-extent block needs no 8-row padding -> no dead MXU
        # rows, no output slice at the end.
        tco = C_out
        c_out_pad = C_out
    else:
        tco = _round_up(pl.cdiv(c_out_8, n_co), 8)
        c_out_pad = tco * n_co

    if c_out_pad != C_out:
        weight = jnp.pad(weight, ((0, c_out_pad - C_out), (0, 0)))

    # ---- Grid order: never re-stream the more expensive operand -------------
    # (B, n_co): x fetched once, weight re-fetched per batch element (if n_co>1).
    # (n_co, B): weight fetched once, x re-fetched per channel tile.
    w_redundant = (B - 1) * c_out_pad * C_in * w_elt if n_co > 1 else 0
    x_redundant = (n_co - 1) * B * C_in * L * x_elt
    b_outer = w_redundant <= x_redundant
    if b_outer:
        grid = (B, n_co)
        x_map = lambda b, co: (b, 0, 0)
        w_map = lambda b, co: (co, 0)
        o_map = lambda b, co: (b, co, 0)
    else:
        grid = (n_co, B)
        x_map = lambda co, b: (b, 0, 0)
        w_map = lambda co, b: (co, 0)
        o_map = lambda co, b: (b, co, 0)

    vmem_limit = int(min(budget, max(32 << 20, vmem_need(tco))))

    # Advisory cost estimate: helps XLA overlap surrounding ops with the kernel.
    x_traffic = B * C_in * L * x_elt * (1 if b_outer else n_co)
    w_traffic = c_out_pad * C_in * w_elt * (B if (b_outer and n_co > 1) else 1)
    o_traffic = B * c_out_pad * L * out_elt
    cost = pl.CostEstimate(
        flops=2 * B * c_out_pad * C_in * L,
        transcendentals=B * c_out_pad,
        bytes_accessed=x_traffic + w_traffic + o_traffic,
    )

    kernel = functools.partial(
        _linear_in_relu_kernel,
        inv_l=1.0 / L,
        compute_dtype=jnp.bfloat16 if use_bf16_matmul else None,
    )

    out = pl.pallas_call(
        kernel,
        out_shape=jax.ShapeDtypeStruct((B, c_out_pad, L), out_dtype),
        grid_spec=pltpu.PrefetchScalarGridSpec(
            num_scalar_prefetch=0,
            grid=grid,
            in_specs=[
                pl.BlockSpec((1, C_in, L), x_map),
                pl.BlockSpec((tco, C_in), w_map),
            ],
            out_specs=pl.BlockSpec((1, tco, L), o_map),
        ),
        compiler_params=pltpu.CompilerParams(
            dimension_semantics=("parallel", "parallel"),
            vmem_limit_bytes=vmem_limit,
        ),
        cost_estimate=cost,
    )(x, weight)

    if c_out_pad != C_out:
        out = out[:, :C_out, :]
    return out


def _reference(x, weight, bias):
    # Pure-JAX reference matching the PyTorch forward exactly (bias included).
    y = jnp.einsum("bcl,oc->bol", x, weight) + bias[None, :, None]
    mean = jnp.mean(y, axis=2, keepdims=True)
    var = jnp.mean((y - mean) ** 2, axis=2, keepdims=True)
    y = (y - mean) / jnp.sqrt(var + 1e-5)
    return jnp.where(y >= 0, y, 0.1 * y)


def _make_inputs(key, B, C_in, C_out, L):
    kx, kw, kb = jax.random.split(key, 3)
    bound = 1.0 / (C_in ** 0.5)  # PyTorch nn.Linear default init range
    weight = jax.random.uniform(kw, (C_out, C_in), jnp.float32, -bound, bound)
    bias = jax.random.uniform(kb, (C_out,), jnp.float32, -bound, bound)
    x = jax.random.normal(kx, (B, C_in, L), jnp.float32)
    return x, weight, bias


def _check(name, x, weight, bias, atol, rtol, **kw):
    out = jax.block_until_ready(linear_batch_relu(x, weight, bias, **kw))
    ref = _reference(x, weight, bias)
    assert out.shape == ref.shape, f"{name}: shape {out.shape} vs {ref.shape}"
    assert jnp.allclose(out, ref, atol=atol, rtol=rtol), f"{name}: mismatch vs reference"


if __name__ == "__main__":
    key = jax.random.PRNGKey(0)
    k1, k2, k3, k4, k5 = jax.random.split(key, 5)

    # 1) Base shape, single C_out tile, f32.
    _check("base", *_make_inputs(k1, B=2, C_in=4, C_out=8, L=16), atol=1e-4, rtol=1e-4)

    # 2) Ragged dims + forced C_out tiling (exercises padding / slice path).
    _check("tiled", *_make_inputs(k2, B=2, C_in=5, C_out=20, L=20),
           atol=1e-4, rtol=1e-4, co_tile=8)

    # 3) C_in >= L: grid order flips so the weight is fetched only once.
    _check("co_outer", *_make_inputs(k3, B=4, C_in=32, C_out=48, L=8),
           atol=1e-4, rtol=1e-4, co_tile=16)

    # 4) B == 1: channel axis split further so both v7x cores get work.
    _check("megacore", *_make_inputs(k4, B=1, C_in=4, C_out=32, L=16),
           atol=1e-4, rtol=1e-4)

    # 5) bf16 MXU fast path (in-kernel cast), loose tolerance.
    _check("bf16", *_make_inputs(k5, B=2, C_in=4, C_out=8, L=16),
           atol=8e-2, rtol=5e-2, use_bf16_matmul=True)

    print("KERNEL_OK")
</pallas_src>

<mosaic_0001>
module attributes {stable_mosaic.version = 11 : i64} {
  func.func @_linear_in_relu_kernel(%arg0: i32, %arg1: i32, %arg2: memref<1x4x16xf32, #tpu.memory_space<vmem>>, %arg3: memref<8x4xf32, #tpu.memory_space<vmem>>, %arg4: memref<1x8x16xf32, #tpu.memory_space<vmem>>) attributes {dimension_semantics = [#tpu.dimension_semantics<parallel>, #tpu.dimension_semantics<parallel>], iteration_bounds = array<i64: 2, 1>, scalar_prefetch = 0 : i64, scratch_operands = 0 : i64, tpu.core_type = #tpu.core_type<tc>, window_params = [{transform_indices = @transform_0, window_bounds = array<i64: 1, 4, 16>}, {transform_indices = @transform_1, window_bounds = array<i64: 8, 4>}, {transform_indices = @transform_2, window_bounds = array<i64: 1, 8, 16>}]} {
    %c0 = arith.constant 0 : index
    %c0_0 = arith.constant 0 : index
    %c0_1 = arith.constant 0 : index
    %0 = vector.load %arg2[%c0, %c0_0, %c0_1] : memref<1x4x16xf32, #tpu.memory_space<vmem>>, vector<1x4x16xf32>
    %1 = vector.shape_cast %0 : vector<1x4x16xf32> to vector<4x16xf32>
    %c0_2 = arith.constant 0 : index
    %c0_3 = arith.constant 0 : index
    %2 = vector.load %arg3[%c0_2, %c0_3] : memref<8x4xf32, #tpu.memory_space<vmem>>, vector<8x4xf32>
    %cst = arith.constant dense<0.000000e+00> : vector<8x16xf32>
    %3 = tpu.matmul %2, %1, %cst {dimension_numbers = #tpu.dot_dimension_numbers<[1], [0], [0], [1], [0, 0, 1, 1], [], []>} : vector<8x4xf32>, vector<4x16xf32>, vector<8x16xf32> -> vector<8x16xf32>
    %cst_4 = arith.constant dense<0.000000e+00> : vector<8xf32>
    %4 = vector.multi_reduction <add>, %3, %cst_4 [1] : vector<8x16xf32> to vector<8xf32>
    %5 = vector.shape_cast %4 : vector<8xf32> to vector<8x1xf32>
    %6 = arith.mulf %3, %3 : vector<8x16xf32>
    %cst_5 = arith.constant dense<0.000000e+00> : vector<8xf32>
    %7 = vector.multi_reduction <add>, %6, %cst_5 [1] : vector<8x16xf32> to vector<8xf32>
    %8 = vector.shape_cast %7 : vector<8xf32> to vector<8x1xf32>
    %cst_6 = arith.constant 6.250000e-02 : f32
    %9 = vector.broadcast %cst_6 : f32 to vector<8x1xf32>
    %10 = arith.mulf %5, %9 : vector<8x1xf32>
    %cst_7 = arith.constant 6.250000e-02 : f32
    %11 = vector.broadcast %cst_7 : f32 to vector<8x1xf32>
    %12 = arith.mulf %8, %11 : vector<8x1xf32>
    %13 = arith.mulf %10, %10 : vector<8x1xf32>
    %14 = arith.subf %12, %13 : vector<8x1xf32>
    %cst_8 = arith.constant 0.000000e+00 : f32
    %15 = vector.broadcast %cst_8 : f32 to vector<8x1xf32>
    %16 = arith.maximumf %14, %15 : vector<8x1xf32>
    %cst_9 = arith.constant 9.99999974E-6 : f32
    %17 = vector.broadcast %cst_9 : f32 to vector<8x1xf32>
    %18 = arith.addf %16, %17 : vector<8x1xf32>
    %19 = math.rsqrt %18 : vector<8x1xf32>
    %20 = vector.broadcast %10 : vector<8x1xf32> to vector<8x16xf32>
    %21 = arith.subf %3, %20 : vector<8x16xf32>
    %22 = vector.broadcast %19 : vector<8x1xf32> to vector<8x16xf32>
    %23 = arith.mulf %21, %22 : vector<8x16xf32>
    %cst_10 = arith.constant 1.000000e-01 : f32
    %24 = vector.broadcast %cst_10 : f32 to vector<8x16xf32>
    %25 = arith.mulf %24, %23 : vector<8x16xf32>
    %26 = arith.maximumf %23, %25 : vector<8x16xf32>
    %c0_11 = arith.constant 0 : index
    %c0_12 = arith.constant 0 : index
    %c0_13 = arith.constant 0 : index
    %27 = vector.load %arg4[%c0_11, %c0_12, %c0_13] : memref<1x8x16xf32, #tpu.memory_space<vmem>>, vector<1x8x16xf32>
    %28 = vector.shape_cast %27 : vector<1x8x16xf32> to vector<8x16xf32>
    %29 = vector.shape_cast %26 : vector<8x16xf32> to vector<1x8x16xf32>
    tpu.vector_store %arg4[%c0_11, %c0_12, %c0_13], %29 {strides = array<i32>} : memref<1x8x16xf32, #tpu.memory_space<vmem>>, vector<1x8x16xf32>,
    return
  }
  func.func @transform_0(%arg0: i32, %arg1: i32) -> (i32, i32, i32) {
    %c0_i32 = arith.constant 0 : i32
    %c0_i32_0 = arith.constant 0 : i32
    %c0_i32_1 = arith.constant 0 : i32
    return %arg0, %c0_i32, %c0_i32_0 : i32, i32, i32
  }
  func.func @transform_1(%arg0: i32, %arg1: i32) -> (i32, i32) {
    %c0_i32 = arith.constant 0 : i32
    %c0_i32_0 = arith.constant 0 : i32
    return %arg1, %c0_i32 : i32, i32
  }
  func.func @transform_2(%arg0: i32, %arg1: i32) -> (i32, i32, i32) {
    %c0_i32 = arith.constant 0 : i32
    %c0_i32_0 = arith.constant 0 : i32
    return %arg0, %arg1, %c0_i32 : i32, i32, i32
  }
}

</mosaic_0001>

<llo_original>
// kernel: tpu_custom_call.1
$region0: #{tpu_custom_call.1}
  #allocation0 [shape = 'u32[]', space=smem, size = 0x4, offset = 0x4, fixed_abs, tag = 'smem constant byte address 0x4 - core index']
  #allocation1 [shape = 'u32[144,128]{1,0:T(1,128)}', space=vmem, size = 0x12000, scoped, tag = 'internal scratch']
  %s0 = inlined_call_operand.vmem [shape: f32[2,4,16], index: 0, kind: input, shape index: {}]
  %s1 = inlined_call_operand.vmem [shape: f32[8,4], index: 1, kind: input, shape index: {}]
  %s2 = inlined_call_operand.hbm [shape: f32[2,8,16], index: 2, kind: output, shape index: {}]
  %s3 = sld [smem:[#allocation0]]
  $region41: #{tpu_custom_call.1} parent=0
    _
  %s5 = ssub.s32 1, %s3
  %s6 = scalar_select 0, %s5, %s3
  $region1: #{tpu_custom_call.1} parent=0
    #allocation2 [shape = 'u8[8192]{0}', space=vmem, size = 0x2000, scoped, tag = 'output window, operand 0']
    #allocation3 [shape = 's32[2]{0}', space=sflag, size = 0x8, scoped, tag = 'scoped memory for tpu_custom_call.1']
    %7 = vsyncpa [#allocation3], 0
    %s8 = scalar_lea.sflag [#allocation3], 1
    %9 = vsyncpa %s8, 0
    loop: start=0, step=1, limit=4
    $region2: #{tpu_custom_call.1} parent=1 // loop_pre_header
      _
    $region3: #{tpu_custom_call.1} parent=1 // loop_header
      %s11 = sphi 0, %s15
      %p12 = scmp.ge.s32.totalorder %s11, 4
      %s18 = sphi 0, %s30
      %s19 = sphi 0, %s26
      %s20 = sphi 0, %s18
      %s21 = sphi 0, %s19
      %s22 = sphi 0, %s20
      %s23 = sphi 0, %s21
      %s33 = sphi 0, %s35
      %s36 = sphi 0, %s33
      %s37 = sphi 0, %s36
      %s53 = sphi 0, %s37
      %s59 = sphi 0, %s61
      %s62 = sphi 0, %s59
      %s63 = sphi 0, %s62
      %s79 = sphi 0, %s63
      %s87 = sphi 0, %s89
      %s90 = sphi 0, %s87
      %s91 = sphi 0, %s90
      %s107 = sphi 0, %s91
    $region4: #{tpu_custom_call.1} parent=1 // loop_header_branch
      %14 = sbr.rel (%p12) target = $region8
    $region5: #{tpu_custom_call.1} parent=1 // loop_body
      %s16 = ssub.s32 %s11, 1
      %s17 = ssub.s32 %s11, 2
      %s24 = sadd.s32 1, %s19
      %p25 = scmp.ge.s32.totalorder %s24, 1
      %s26 = scalar_select %p25, 0, %s24
      %s27 = sadd.s32 1, %s18
      %s28 = scalar_select %p25, %s27, %s18
      %p29 = scmp.ge.s32.totalorder %s28, 2
      %s30 = scalar_select %p29, 0, %s28
      %s31 = ssub.s32 %s18, %s30
      %p32 = scmp.eq.s32.totalorder %s31, 0
      %s34 = sadd.s32 %s33, 1
      %s35 = scalar_select %p32, %s33, %s34
      %p38 = pneg %p32
      %p39 = scmp.eq.s32.totalorder %s11, 1
      %p40 = por %p38, %p39
      %p41 = scmp.ne.s32.totalorder %s33, %s36
      %p42 = scmp.eq.s32.totalorder %s11, 0
      %p43 = por %p41, %p42
      %p44 = scmp.ne.s32.totalorder %s33, %s36
      %p45 = scmp.eq.s32.totalorder %s16, 1
      %p46 = por %p44, %p45
      %p47 = scmp.ne.s32.totalorder %s36, %s37
      %p48 = scmp.eq.s32.totalorder %s16, 0
      %p49 = por %p47, %p48
      %p50 = scmp.ne.s32.totalorder %s36, %s37
      %p51 = scmp.eq.s32.totalorder %s17, 1
      %p52 = por %p50, %p51
      %p54 = scmp.ne.s32.totalorder %s37, %s53
      %p55 = scmp.eq.s32.totalorder %s17, 0
      %p56 = por %p54, %p55
      %s57 = ssub.s32 %s19, %s26
      %p58 = scmp.eq.s32.totalorder %s57, 0
      %s60 = sadd.s32 %s59, 1
      %s61 = scalar_select %p58, %s59, %s60
      %p64 = pneg %p58
      %p65 = scmp.eq.s32.totalorder %s11, 1
      %p66 = por %p64, %p65
      %p67 = scmp.ne.s32.totalorder %s59, %s62
      %p68 = scmp.eq.s32.totalorder %s11, 0
      %p69 = por %p67, %p68
      %p70 = scmp.ne.s32.totalorder %s59, %s62
      %p71 = scmp.eq.s32.totalorder %s16, 1
      %p72 = por %p70, %p71
      %p73 = scmp.ne.s32.totalorder %s62, %s63
      %p74 = scmp.eq.s32.totalorder %s16, 0
      %p75 = por %p73, %p74
      %p76 = scmp.ne.s32.totalorder %s62, %s63
      %p77 = scmp.eq.s32.totalorder %s17, 1
      %p78 = por %p76, %p77
      %p80 = scmp.ne.s32.totalorder %s63, %s79
      %p81 = scmp.eq.s32.totalorder %s17, 0
      %p82 = por %p80, %p81
      %s83 = ssub.s32 %s18, %s30
      %s84 = ssub.s32 %s19, %s26
      %s85 = sor.u32 %s83, %s84
      %p86 = scmp.eq.s32.totalorder %s85, 0
      %s88 = sadd.s32 %s87, 1
      %s89 = scalar_select %p86, %s87, %s88
      %p92 = pneg %p86
      %p93 = scmp.eq.s32.totalorder %s11, 1
      %p94 = por %p92, %p93
      %p95 = scmp.ne.s32.totalorder %s87, %s90
      %p96 = scmp.eq.s32.totalorder %s11, 0
      %p97 = por %p95, %p96
      %p98 = scmp.ne.s32.totalorder %s87, %s90
      %p99 = scmp.eq.s32.totalorder %s16, 1
      %p100 = por %p98, %p99
      %p101 = scmp.ne.s32.totalorder %s90, %s91
      %p102 = scmp.eq.s32.totalorder %s16, 0
      %p103 = por %p101, %p102
      %p104 = scmp.ne.s32.totalorder %s90, %s91
      %p105 = scmp.eq.s32.totalorder %s17, 1
      %p106 = por %p104, %p105
      %p108 = scmp.ne.s32.totalorder %s91, %s107
      %p109 = scmp.eq.s32.totalorder %s17, 0
      %p110 = por %p108, %p109
      %p111 = scmp.le.s32.totalorder 1, %s11
      %p112 = scmp.lt.s32.totalorder %s11, 3
      %p113 = pnand %p111, %p112
      %p114 = pneg %p113
      // Predicated region
      $region9: #{tpu_custom_call.1} parent=5 // pred_check
        _
      $region10: #{tpu_custom_call.1} parent=5 // pred_check_branch
        %116 = sbr.rel (%p113) target = $region12
      $region11: #{tpu_custom_call.1} parent=5 // pred_region
        %s117 = ssub.s32 %s11, 1
        // Predicated region
        $region13: #{tpu_custom_call.1} parent=11 // pred_check
          %p118 = pneg %p75
        $region14: #{tpu_custom_call.1} parent=11 // pred_check_branch
          %120 = sbr.rel (%p118) target = $region16
        $region15: #{tpu_custom_call.1} parent=11 // pred_region
          %p121 = scmp.lt.s32.totalorder %s21, 0
          %s122 = scalar_select %p121, %s21, 0
          %s123 = smul.addr %s122, 8
          %s124 = scalar_lea.vmem %s1, %s123
        $region16: #{tpu_custom_call.1} parent=11 // pred_fallthru
          _
      $region12: #{tpu_custom_call.1} parent=5 // pred_fallthru
        _
      %p125 = scmp.lt.s32.totalorder %s11, 2
      // Predicated region
      $region17: #{tpu_custom_call.1} parent=5 // pred_check
        %p126 = pneg %p125
      $region18: #{tpu_custom_call.1} parent=5 // pred_check_branch
        %128 = sbr.rel (%p126) target = $region20
      $region19: #{tpu_custom_call.1} parent=5 // pred_region
        // Predicated region
        $region21: #{tpu_custom_call.1} parent=19 // pred_check
          %p129 = pneg %p43
        $region22: #{tpu_custom_call.1} parent=19 // pred_check_branch
          %131 = sbr.rel (%p129) target = $region24
        $region23: #{tpu_custom_call.1} parent=19 // pred_region
          %p132 = scmp.lt.s32.totalorder %s18, 1
          %s133 = scalar_select %p132, %s18, 1
          %s134 = smul.addr %s133, 4
          %s135 = scalar_lea.vmem %s0, %s134
        $region24: #{tpu_custom_call.1} parent=19 // pred_fallthru
          _
      $region20: #{tpu_custom_call.1} parent=5 // pred_fallthru
        _
      %p136 = scmp.le.s32.totalorder 1, %s11
      %p137 = scmp.lt.s32.totalorder %s11, 3
      %p138 = pnand %p136, %p137
      %p139 = pneg %p138
      // Predicated region
      $region25: #{tpu_custom_call.1} parent=5 // pred_check
        _
      $region26: #{tpu_custom_call.1} parent=5 // pred_check_branch
        %141 = sbr.rel (%p138) target = $region28
      $region27: #{tpu_custom_call.1} parent=5 // pred_region
        %s142 = ssub.s32 %s11, 1
        %p143 = scmp.lt.s32.totalorder %s20, 1
        %s144 = scalar_select %p143, %s20, 1
        %s145 = smul.addr %s144, 4
        %s146 = scalar_lea.vmem %s0, %s145
        %p147 = pneg %p49
        %p148 = pneg %p46
        %p149 = scmp.lt.s32.totalorder %s21, 0
        %s150 = scalar_select %p149, %s21, 0
        %s151 = smul.addr %s150, 8
        %s152 = scalar_lea.vmem %s1, %s151
        %p153 = pneg %p75
        %p154 = pneg %p72
        %p155 = pneg %p103
        %p156 = pneg %p100
        %s157 = sand.u32 %s90, 1
        %s158 = scalar_lea.sflag [#allocation3], %s157
        %s159 = sand.u32 %s90, 1
        %s160 = smul.addr %s159, 8
        %s161 = scalar_lea.vmem [#allocation2], %s160
        %p162 = scmp.lt.s32.totalorder %s20, 1
        %s163 = scalar_select %p162, %s20, 1
        %s164 = smul.addr %s163, 4
        %s165 = scalar_lea.vmem %s0, %s164
        %p166 = scmp.lt.s32.totalorder %s21, 0
        %s167 = scalar_select %p166, %s21, 0
        %s168 = smul.addr %s167, 8
        %s169 = scalar_lea.vmem %s1, %s168
        %v170 = vld [vmem:[%s165] sm:$0xf]
        %v171 = vld [vmem:[%s169] sm:$0xff]
        %vm172 = vcmask 31744
        %v174 = vsel %vm172, %v171, 0
        %vm176 = vcmask 1043456
        %v178 = vsel %vm176, %v170, 0
        %180 = vmatprep.subr.mxu0 0.0
        %181 = vmatpush1.msra.mxu0 0.0
        %182 = vmatprep.subr.mxu0 0.0
        %183 = vmatpush1.msra.mxu0 0.0
        %184 = vmatprep.subr.mxu0 0.0
        %185 = vmatpush1.msra.mxu0 0.0
        %186 = vmatprep.subr.mxu0 0.0
        %187 = vmatpush1.msra.mxu0 0.0
        %188 = vmatprep.subr.mxu0 0.0
        %189 = vmatpush1.msra.mxu0 0.0
        %190 = vmatprep.subr.mxu0 0.0
        %191 = vmatpush1.msra.mxu0 0.0
        %192 = vmatprep.subr.mxu0 0.0
        %193 = vmatpush1.msra.mxu0 0.0
        %194 = vmatprep.subr.mxu0 0.0
        %195 = vmatpush1.msra.mxu0 0.0
        %196 = vmatprep.subr.mxu0 0.0
        %197 = vmatpush1.msra.mxu0 0.0
        %198 = vmatprep.subr.mxu0 0.0
        %199 = vmatpush1.msra.mxu0 0.0
        %200 = vmatprep.subr.mxu0 0.0
        %201 = vmatpush1.msra.mxu0 0.0
        %202 = vmatprep.subr.mxu0 0.0
        %203 = vmatpush1.msra.mxu0 0.0
        %204 = vmatprep.subr.mxu0 0.0
        %205 = vmatpush1.msra.mxu0 0.0
        %206 = vmatprep.subr.mxu0 0.0
        %207 = vmatpush1.msra.mxu0 0.0
        %208 = vmatprep.subr.mxu0 0.0
        %209 = vmatpush1.msra.mxu0 0.0
        %210 = vmatprep.subr.mxu0 0.0
        %211 = vmatpush1.msra.mxu0 %v178
        %212 = vmatprep.subr.mxu0 0.0
        %213 = vmatpush2.msra.mxu0 0.0
        %214 = vmatprep.subr.mxu0 0.0
        %215 = vmatpush2.msra.mxu0 0.0
        %216 = vmatprep.subr.mxu0 0.0
        %217 = vmatpush2.msra.mxu0 0.0
        %218 = vmatprep.subr.mxu0 0.0
        %219 = vmatpush2.msra.mxu0 0.0
        %220 = vmatprep.subr.mxu0 0.0
        %221 = vmatpush2.msra.mxu0 0.0
        %222 = vmatprep.subr.mxu0 0.0
        %223 = vmatpush2.msra.mxu0 0.0
        %224 = vmatprep.subr.mxu0 0.0
        %225 = vmatpush2.msra.mxu0 0.0
        %226 = vmatprep.subr.mxu0 0.0
        %227 = vmatpush2.msra.mxu0 0.0
        %228 = vmatprep.subr.mxu0 0.0
        %229 = vmatpush2.msra.mxu0 0.0
        %230 = vmatprep.subr.mxu0 0.0
        %231 = vmatpush2.msra.mxu0 0.0
        %232 = vmatprep.subr.mxu0 0.0
        %233 = vmatpush2.msra.mxu0 0.0
        %234 = vmatprep.subr.mxu0 0.0
        %235 = vmatpush2.msra.mxu0 0.0
        %236 = vmatprep.subr.mxu0 0.0
        %237 = vmatpush2.msra.mxu0 0.0
        %238 = vmatprep.subr.mxu0 0.0
        %239 = vmatpush2.msra.mxu0 0.0
        %240 = vmatprep.subr.mxu0 0.0
        %241 = vmatpush2.msra.mxu0 0.0
        %242 = vmatprep.subr.mxu0 0.0
        %243 = vmatpush2.msra.mxu0 0.0
        %244 = vmatprep.mubr.f32.mxu0 0.0
        %245 = vmatmul.mubr.f32.gmra.mxu0 %v174
        %v246 = vpop.f32.mrf.mxu0
        %v247 = vadd.f32 0.0, %v246
        %v248 = vpop.f32.mrf.mxu0
        %249 = vdwg.mxu0
        %vm250 = vcmask 130048
        %v251 = vsel %vm250, %v247, 0.0
        %252 = vadd.xlane.f32.xlu0 %v251
        %v253 = vpop.xlane.xlu0 %252
        %v254 = vmul.f32 %v247, %v247
        %v255 = vsel %vm250, %v254, 0.0
        %256 = vadd.xlane.f32.xlu0 %v255
        %v257 = vpop.xlane.xlu0 %256
        %v258 = vmul.f32 %v253, 0.0625
        %v259 = vmul.f32 %v257, 0.0625
        %v260 = vmul.f32 %v258, %v258
        %v261 = vsub.f32 %v259, %v260
        %v262 = vmax.f32 %v261, 0.0
        %v263 = vadd.f32 %v262, 1e-05
        %v264 = vrsqrt.pop %v263
        %v265 = vsub.f32 %v247, %v258
        %v266 = vmul.f32 %v265, %v264
        %v267 = vmul.f32 %v266, 0.1
        %v268 = vmax.f32 %v266, %v267
        %269 = vst.msk [vmem:[%s161] sm:$0xff] %vm250, %v268
        %s270 = sand.u32 %s90, 1
        %s271 = scalar_lea.sflag [#allocation3], %s270
        %s272 = sand.u32 %s90, 1
        %s273 = smul.addr %s272, 8
        %s274 = scalar_lea.vmem [#allocation2], %s273
        // Predicated region
        $region29: #{tpu_custom_call.1} parent=27 // pred_check
          %p275 = pneg %p100
        $region30: #{tpu_custom_call.1} parent=27 // pred_check_branch
          %277 = sbr.rel (%p275) target = $region32
        $region31: #{tpu_custom_call.1} parent=27 // pred_region
          %s279 = ssub.s32 128, 128
          %280 = vsyncadd %s271, %s279
          %s281 = sadd.s32 %s21, %s20
          %s282 = smul.addr %s281, 128
          %s283 = scalar_lea.hbm %s2, %s282
          %s285 = sshll.u32 %s274, 4
          %s286 = int_to_ptr.vmem [resolvable:$true] %s285
          %288 = dma.vmem_to_hbm [thread:$0]  %s286, 128, %s283, %s271
        $region32: #{tpu_custom_call.1} parent=27 // pred_fallthru
          _
      $region28: #{tpu_custom_call.1} parent=5 // pred_fallthru
        _
      %p289 = scmp.le.s32.totalorder 2, %s11
      // Predicated region
      $region33: #{tpu_custom_call.1} parent=5 // pred_check
        %p290 = pneg %p289
      $region34: #{tpu_custom_call.1} parent=5 // pred_check_branch
        %292 = sbr.rel (%p290) target = $region36
      $region35: #{tpu_custom_call.1} parent=5 // pred_region
        %s293 = ssub.s32 %s11, 2
        // Predicated region
        $region37: #{tpu_custom_call.1} parent=35 // pred_check
          %p294 = pneg %p106
        $region38: #{tpu_custom_call.1} parent=35 // pred_check_branch
          %296 = sbr.rel (%p294) target = $region40
        $region39: #{tpu_custom_call.1} parent=35 // pred_region
          %s297 = sand.u32 %s91, 1
          %s298 = scalar_lea.sflag [#allocation3], %s297
          %s299 = sand.u32 %s91, 1
          %s300 = smul.addr %s299, 8
          %s301 = scalar_lea.vmem [#allocation2], %s300
          %302 = dma.done %s298, 128
        $region40: #{tpu_custom_call.1} parent=35 // pred_fallthru
          _
      $region36: #{tpu_custom_call.1} parent=5 // pred_fallthru
        _
    $region6: #{tpu_custom_call.1} parent=1 // loop_footer
      %s15 = sadd.s32 1, %s11
    $region7: #{tpu_custom_call.1} parent=1 // loop_footer_branch
      %10 = sbr.rel target = $region3
    $region8: #{tpu_custom_call.1} parent=1 // loop_exit
      _
    %303 = vsyncpa [#allocation3], 1
    %s304 = scalar_lea.sflag [#allocation3], 1
    %305 = vsyncpa %s304, 1

</llo_original>
